<compile_context>
chip_gen: v5e
topology: v5e:2x2
jax: 0.10.0
libtpu: 0.0.40
codegen_flags: <defaults>
</compile_context>

<pallas_src>
import functools

import jax
import jax.numpy as jnp
from jax.experimental import pallas as pl
from jax.experimental.pallas import tpu as pltpu


def _rup(n, m):
    return ((n + m - 1) // m) * m


# ---------------------------------------------------------------------------
# Kernel (batch-on-lanes)
# ---------------------------------------------------------------------------
def _realnvp_kernel(xT_ref, w1t_ref, w2t_ref, b2_ref, outT_ref, *,
                    dim, dimp, h2, mo):
    """Fused two-coupling RealNVP forward on one lane tile of the batch.

    xT_ref   : [dimp, TL]   augmented transposed input (row `dim` == 1).
    w1t_ref  : [2*h2, dimp] fused first-layer W^T (bias folded in column `dim`).
    w2t_ref  : [2*mo, h2]   fused second-layer W^T (t rows | s rows | log-det row).
    b2_ref   : [2*mo, 1]    fused second-layer bias column.
    outT_ref : [dimp, TL]   rows 0..dim-1 = z^T, row `dim` = log_det.
    All row offsets are static and 8-aligned; TL is a multiple of 128.
    """
    y = xT_ref[...].astype(jnp.float32)                       # [dimp, TL]

    def coupling(y, c):
        w1 = w1t_ref[pl.ds(c * h2, h2), :]                    # [h2, dimp]
        # Layer-1 bias is carried by the constant-1 row of y (column `dim` of w1).
        h = jnp.tanh(jnp.dot(w1, y, preferred_element_type=jnp.float32))   # [h2, TL]
        w2 = w2t_ref[pl.ds(c * mo, mo), :]                    # [mo, h2]
        b2 = b2_ref[pl.ds(c * mo, mo), :]                     # [mo, 1]
        ts = jnp.dot(w2, h, preferred_element_type=jnp.float32) + b2       # [mo, TL]
        t_aug = ts[0:dimp, :]                                 # zeros on passive rows
        s_aug = ts[dimp:2 * dimp, :]                          # zeros on passive rows
        ld = ts[2 * dimp:2 * dimp + 1, :]                     # [1, TL] MXU-produced log-det
        y_new = t_aug + y * jnp.exp(s_aug)                    # ones row stays exactly 1
        return y_new, ld

    y1, ld1 = coupling(y, 0)        # transform upper, condition on lower
    y2, ld2 = coupling(y1, 1)       # transform lower, condition on (new) upper
    ld = ld1 + ld2                                           # [1, TL]

    # Merge log_det into row `dim` of the lane-dense output slab.
    row = jax.lax.broadcasted_iota(jnp.int32, (dimp, y2.shape[1]), 0)
    out = jnp.where(row == dim, ld, y2)
    outT_ref[...] = out.astype(outT_ref.dtype)


# ---------------------------------------------------------------------------
# Parameter init (matches the torch module's shapes; weights stored [in, out])
# ---------------------------------------------------------------------------
def init_fcnn(key, in_dim, out_dim, hidden, std=0.1):
    k1, k2, k3, k4 = jax.random.split(key, 4)
    return {
        "w1": (std * jax.random.normal(k1, (in_dim, hidden))).astype(jnp.float32),
        "b1": (std * jax.random.normal(k2, (hidden,))).astype(jnp.float32),
        "w2": (std * jax.random.normal(k3, (hidden, out_dim))).astype(jnp.float32),
        "b2": (std * jax.random.normal(k4, (out_dim,))).astype(jnp.float32),
    }


def init_realnvp_params(key, dim, hidden_dim=8):
    dim_2 = dim // 2
    dim_1 = dim - dim_2
    k1, k2, k3, k4 = jax.random.split(key, 4)
    return {
        "t1": init_fcnn(k1, dim_1, dim_2, hidden_dim),
        "s1": init_fcnn(k2, dim_1, dim_2, hidden_dim),
        "t2": init_fcnn(k3, dim_2, dim_1, hidden_dim),
        "s2": init_fcnn(k4, dim_2, dim_1, hidden_dim),
    }


# ---------------------------------------------------------------------------
# Pack the 16 raw tensors into 3 transposed, zero-embedded slabs (done once)
# ---------------------------------------------------------------------------
def pack_realnvp_params(params, dim, hidden):
    dim_2 = dim // 2
    dim_1 = dim - dim_2
    dimp = _rup(dim + 1, 8)          # +1 spare row carries the constant-1 bias lane
    h2 = 2 * hidden
    h2p = _rup(h2, 8)
    mo = _rup(2 * dimp + 1, 8)       # t block | s block | log-det row (+ pad)

    # coupling 0 reads the lower half and writes the upper half; coupling 1 vice versa
    in_sl = (slice(0, dim_1), slice(dim_1, dim))
    out_sl = (slice(dim_1, dim), slice(0, dim_1))
    nets = ((params["t1"], params["s1"]), (params["t2"], params["s2"]))

    w1t = jnp.zeros((2 * h2p, dimp), jnp.float32)
    w2t = jnp.zeros((2 * mo, h2p), jnp.float32)
    b2c = jnp.zeros((2 * mo, 1), jnp.float32)

    for c in range(2):
        t_net, s_net = nets[c]
        r0 = c * h2p
        q0 = c * mo
        isl, osl = in_sl[c], out_sl[c]

        # ----- layer 1: W1^T, input-feature-embedded; b1 folded into column `dim`
        w1t = w1t.at[r0:r0 + hidden, isl].set(t_net["w1"].T)
        w1t = w1t.at[r0:r0 + hidden, dim].set(t_net["b1"])
        w1t = w1t.at[r0 + hidden:r0 + h2, isl].set(s_net["w1"].T)
        w1t = w1t.at[r0 + hidden:r0 + h2, dim].set(s_net["b1"])

        # ----- layer 2: W2^T, output-feature-embedded (t rows | s rows | ld row)
        w2t = w2t.at[q0 + osl.start:q0 + osl.stop, 0:hidden].set(t_net["w2"].T)
        b2c = b2c.at[q0 + osl.start:q0 + osl.stop, 0].set(t_net["b2"])
        w2t = w2t.at[q0 + dimp + osl.start:q0 + dimp + osl.stop,
                     hidden:h2].set(s_net["w2"].T)
        b2c = b2c.at[q0 + dimp + osl.start:q0 + dimp + osl.stop, 0].set(s_net["b2"])
        # log-det = sum_j s_j is linear in h -> one extra MXU output row.
        w2t = w2t.at[q0 + 2 * dimp, hidden:h2].set(jnp.sum(s_net["w2"].T, axis=0))
        b2c = b2c.at[q0 + 2 * dimp, 0].set(jnp.sum(s_net["b2"]))

    meta = dict(dim=dim, dimp=dimp, h2=h2p, mo=mo)
    return w1t, w2t, b2c, meta


# ---------------------------------------------------------------------------
# Forward wrapper
# ---------------------------------------------------------------------------
def realnvp_forward(x, w1t, w2t, b2c, meta, *, max_lane_tile=4096):
    """Pallas RealNVP.forward (translate=False). Returns (z [B,dim], log_det [B])."""
    x = x.astype(jnp.float32)
    B, dim = x.shape
    assert dim == meta["dim"]
    dimp, h2, mo = meta["dimp"], meta["h2"], meta["mo"]

    LANE = 128
    Bp0 = _rup(B, LANE)
    if Bp0 <= 2 * LANE:
        TL = Bp0                       # tiny batch: a single lane tile
    else:
        # Big tiles amortize per-grid-step overhead; keep >= 2 parallel steps
        # so v7x's two TensorCores can split the batch axis.
        TL = min(max_lane_tile, _rup(pl.cdiv(Bp0, 2), LANE))
    Bp = _rup(B, TL)

    # Augmented transposed input slab: rows 0..dim-1 = x^T, row `dim` = 1.
    # TODO(synk): upstream producers could emit this layout directly and skip
    #             the XLA-side transpose.
    xT = jnp.zeros((dimp, Bp), jnp.float32)
    xT = xT.at[:dim, :B].set(x.T)
    xT = xT.at[dim, :].set(1.0)

    kernel = functools.partial(_realnvp_kernel, dim=dim, dimp=dimp, h2=h2, mo=mo)

    # Advisory cost: tiny flops / bytes, a handful of transcendentals.
    flops = 4 * Bp * h2 * (dimp + mo)
    transcendentals = 2 * Bp * (h2 + dimp)
    bytes_accessed = 4 * (2 * dimp * Bp + w1t.size + w2t.size + b2c.size)

    outT = pl.pallas_call(
        kernel,
        out_shape=jax.ShapeDtypeStruct((dimp, Bp), jnp.float32),
        grid=(Bp // TL,),
        in_specs=[
            pl.BlockSpec((dimp, TL), lambda i: (0, i)),
            pl.BlockSpec(w1t.shape, lambda i: (0, 0)),   # constant-index slabs:
            pl.BlockSpec(w2t.shape, lambda i: (0, 0)),   #   fetched once, resident
            pl.BlockSpec(b2c.shape, lambda i: (0, 0)),
        ],
        out_specs=pl.BlockSpec((dimp, TL), lambda i: (0, i)),
        compiler_params=pltpu.CompilerParams(
            dimension_semantics=("parallel",)),
        cost_estimate=pl.CostEstimate(
            flops=flops, transcendentals=transcendentals,
            bytes_accessed=bytes_accessed),
    )(xT, w1t, w2t, b2c)

    z = outT[:dim, :B].T          # [B, dim]
    log_det = outT[dim, :B]       # [B]
    return z, log_det


# ---------------------------------------------------------------------------
# Plain-JAX reference (mirrors the PyTorch module, translate=False)
# ---------------------------------------------------------------------------
def realnvp_forward_ref(x, params, dim):
    x = x.astype(jnp.float32)
    dim_2 = dim // 2
    dim_1 = dim - dim_2

    def fcnn(p, inp):
        return jnp.tanh(inp @ p["w1"] + p["b1"]) @ p["w2"] + p["b2"]

    lower, upper = x[:, :dim_1], x[:, dim_1:]
    t1 = fcnn(params["t1"], lower)
    s1 = fcnn(params["s1"], lower)
    upper = t1 + upper * jnp.exp(s1)
    t2 = fcnn(params["t2"], upper)
    s2 = fcnn(params["s2"], upper)
    lower = t2 + lower * jnp.exp(s2)
    z = jnp.concatenate([lower, upper], axis=1)
    log_det = jnp.sum(s1, axis=1) + jnp.sum(s2, axis=1)
    return z, log_det


if __name__ == "__main__":
    # Small shapes consistent with the module: state dim=5 (dim_1=3, dim_2=2),
    # hidden=32, batch=8.
    B, dim, hidden_dim = 8, 5, 32

    key = jax.random.PRNGKey(0)
    kx, kp = jax.random.split(key)
    x = jax.random.normal(kx, (B, dim), dtype=jnp.float32)
    params = init_realnvp_params(kp, dim, hidden_dim)

    w1t, w2t, b2c, meta = pack_realnvp_params(params, dim, hidden_dim)

    z, log_det = realnvp_forward(x, w1t, w2t, b2c, meta)
    z = jax.block_until_ready(z)
    log_det = jax.block_until_ready(log_det)

    z_ref, log_det_ref = realnvp_forward_ref(x, params, dim)
    assert z.shape == (B, dim) and log_det.shape == (B,)
    assert jnp.allclose(z, z_ref, atol=1e-5, rtol=1e-4), (z, z_ref)
    assert jnp.allclose(log_det, log_det_ref, atol=1e-5, rtol=1e-4), (log_det, log_det_ref)

    print("KERNEL_OK")
</pallas_src>

<mosaic_0001>
module attributes {stable_mosaic.version = 11 : i64} {
  func.func @_realnvp_kernel(%arg0: i32, %arg1: memref<8x128xf32, #tpu.memory_space<vmem>>, %arg2: memref<128x8xf32, #tpu.memory_space<vmem>>, %arg3: memref<48x64xf32, #tpu.memory_space<vmem>>, %arg4: memref<48x1xf32, #tpu.memory_space<vmem>>, %arg5: memref<8x128xf32, #tpu.memory_space<vmem>>) attributes {dimension_semantics = [#tpu.dimension_semantics<parallel>], iteration_bounds = array<i64: 1>, scalar_prefetch = 0 : i64, scratch_operands = 0 : i64, tpu.core_type = #tpu.core_type<tc>, window_params = [{transform_indices = @transform_0, window_bounds = array<i64: 8, 128>}, {pipeline_mode = #tpu.pipeline_mode<synchronous>, transform_indices = @transform_1, window_bounds = array<i64: 128, 8>}, {pipeline_mode = #tpu.pipeline_mode<synchronous>, transform_indices = @transform_2, window_bounds = array<i64: 48, 64>}, {pipeline_mode = #tpu.pipeline_mode<synchronous>, transform_indices = @transform_3, window_bounds = array<i64: 48, 1>}, {transform_indices = @transform_4, window_bounds = array<i64: 8, 128>}]} {
    %c0 = arith.constant 0 : index
    %c0_0 = arith.constant 0 : index
    %0 = vector.load %arg1[%c0, %c0_0] : memref<8x128xf32, #tpu.memory_space<vmem>>, vector<8x128xf32>
    %c0_1 = arith.constant 0 : index
    %c0_2 = arith.constant 0 : index
    %1 = vector.load %arg2[%c0_1, %c0_2] : memref<128x8xf32, #tpu.memory_space<vmem>>, vector<64x8xf32>
    %cst = arith.constant dense<0.000000e+00> : vector<64x128xf32>
    %2 = tpu.matmul %1, %0, %cst {dimension_numbers = #tpu.dot_dimension_numbers<[1], [0], [0], [1], [0, 0, 1, 1], [], []>} : vector<64x8xf32>, vector<8x128xf32>, vector<64x128xf32> -> vector<64x128xf32>
    %3 = math.tanh %2 : vector<64x128xf32>
    %c0_3 = arith.constant 0 : index
    %c0_4 = arith.constant 0 : index
    %4 = vector.load %arg3[%c0_3, %c0_4] : memref<48x64xf32, #tpu.memory_space<vmem>>, vector<24x64xf32>
    %c0_5 = arith.constant 0 : index
    %c0_6 = arith.constant 0 : index
    %5 = vector.load %arg4[%c0_5, %c0_6] : memref<48x1xf32, #tpu.memory_space<vmem>>, vector<24x1xf32>
    %cst_7 = arith.constant dense<0.000000e+00> : vector<24x128xf32>
    %6 = tpu.matmul %4, %3, %cst_7 {dimension_numbers = #tpu.dot_dimension_numbers<[1], [0], [0], [1], [0, 0, 1, 1], [], []>} : vector<24x64xf32>, vector<64x128xf32>, vector<24x128xf32> -> vector<24x128xf32>
    %7 = vector.broadcast %5 : vector<24x1xf32> to vector<24x128xf32>
    %8 = arith.addf %6, %7 : vector<24x128xf32>
    %9 = vector.extract_strided_slice %8 {offsets = [0, 0], sizes = [8, 128], strides = [1, 1]} : vector<24x128xf32> to vector<8x128xf32>
    %10 = vector.extract_strided_slice %8 {offsets = [8, 0], sizes = [8, 128], strides = [1, 1]} : vector<24x128xf32> to vector<8x128xf32>
    %11 = vector.extract_strided_slice %8 {offsets = [16, 0], sizes = [1, 128], strides = [1, 1]} : vector<24x128xf32> to vector<1x128xf32>
    %12 = math.exp %10 : vector<8x128xf32>
    %13 = arith.mulf %0, %12 : vector<8x128xf32>
    %14 = arith.addf %9, %13 : vector<8x128xf32>
    %c64 = arith.constant 64 : index
    %c0_8 = arith.constant 0 : index
    %15 = vector.load %arg2[%c64, %c0_8] : memref<128x8xf32, #tpu.memory_space<vmem>>, vector<64x8xf32>
    %cst_9 = arith.constant dense<0.000000e+00> : vector<64x128xf32>
    %16 = tpu.matmul %15, %14, %cst_9 {dimension_numbers = #tpu.dot_dimension_numbers<[1], [0], [0], [1], [0, 0, 1, 1], [], []>} : vector<64x8xf32>, vector<8x128xf32>, vector<64x128xf32> -> vector<64x128xf32>
    %17 = math.tanh %16 : vector<64x128xf32>
    %c24 = arith.constant 24 : index
    %c0_10 = arith.constant 0 : index
    %18 = vector.load %arg3[%c24, %c0_10] : memref<48x64xf32, #tpu.memory_space<vmem>>, vector<24x64xf32>
    %c24_11 = arith.constant 24 : index
    %c0_12 = arith.constant 0 : index
    %19 = vector.load %arg4[%c24_11, %c0_12] : memref<48x1xf32, #tpu.memory_space<vmem>>, vector<24x1xf32>
    %cst_13 = arith.constant dense<0.000000e+00> : vector<24x128xf32>
    %20 = tpu.matmul %18, %17, %cst_13 {dimension_numbers = #tpu.dot_dimension_numbers<[1], [0], [0], [1], [0, 0, 1, 1], [], []>} : vector<24x64xf32>, vector<64x128xf32>, vector<24x128xf32> -> vector<24x128xf32>
    %21 = vector.broadcast %19 : vector<24x1xf32> to vector<24x128xf32>
    %22 = arith.addf %20, %21 : vector<24x128xf32>
    %23 = vector.extract_strided_slice %22 {offsets = [0, 0], sizes = [8, 128], strides = [1, 1]} : vector<24x128xf32> to vector<8x128xf32>
    %24 = vector.extract_strided_slice %22 {offsets = [8, 0], sizes = [8, 128], strides = [1, 1]} : vector<24x128xf32> to vector<8x128xf32>
    %25 = vector.extract_strided_slice %22 {offsets = [16, 0], sizes = [1, 128], strides = [1, 1]} : vector<24x128xf32> to vector<1x128xf32>
    %26 = math.exp %24 : vector<8x128xf32>
    %27 = arith.mulf %14, %26 : vector<8x128xf32>
    %28 = arith.addf %23, %27 : vector<8x128xf32>
    %29 = arith.addf %11, %25 : vector<1x128xf32>
    %30 = tpu.iota {dimensions = array<i32: 0>} : vector<8x128xi32>
    %c5_i32 = arith.constant 5 : i32
    %31 = vector.broadcast %c5_i32 : i32 to vector<8x128xi32>
    %32 = arith.cmpi eq, %30, %31 : vector<8x128xi32>
    %33 = vector.shape_cast %29 : vector<1x128xf32> to vector<1x128xf32>
    %34 = vector.broadcast %33 : vector<1x128xf32> to vector<8x128xf32>
    %35 = arith.select %32, %34, %28 : vector<8x128xi1>, vector<8x128xf32>
    %c0_14 = arith.constant 0 : index
    %c0_15 = arith.constant 0 : index
    %36 = vector.load %arg5[%c0_14, %c0_15] : memref<8x128xf32, #tpu.memory_space<vmem>>, vector<8x128xf32>
    tpu.vector_store %arg5[%c0_14, %c0_15], %35 {strides = array<i32>} : memref<8x128xf32, #tpu.memory_space<vmem>>, vector<8x128xf32>,
    return
  }
  func.func @transform_0(%arg0: i32) -> (i32, i32) {
    %c0_i32 = arith.constant 0 : i32
    %c0_i32_0 = arith.constant 0 : i32
    return %c0_i32, %arg0 : i32, i32
  }
  func.func @transform_1(%arg0: i32) -> (i32, i32) {
    %c0_i32 = arith.constant 0 : i32
    %c0_i32_0 = arith.constant 0 : i32
    %c0_i32_1 = arith.constant 0 : i32
    return %c0_i32, %c0_i32_0 : i32, i32
  }
  func.func @transform_2(%arg0: i32) -> (i32, i32) {
    %c0_i32 = arith.constant 0 : i32
    %c0_i32_0 = arith.constant 0 : i32
    %c0_i32_1 = arith.constant 0 : i32
    return %c0_i32, %c0_i32_0 : i32, i32
  }
  func.func @transform_3(%arg0: i32) -> (i32, i32) {
    %c0_i32 = arith.constant 0 : i32
    %c0_i32_0 = arith.constant 0 : i32
    %c0_i32_1 = arith.constant 0 : i32
    return %c0_i32, %c0_i32_0 : i32, i32
  }
  func.func @transform_4(%arg0: i32) -> (i32, i32) {
    %c0_i32 = arith.constant 0 : i32
    %c0_i32_0 = arith.constant 0 : i32
    return %c0_i32, %arg0 : i32, i32
  }
}

</mosaic_0001>

<llo_original>
// kernel: tpu_custom_call.1
$region0: #{tpu_custom_call.1}
  #allocation0 [shape = 'u32[]', space=smem, size = 0x4, offset = 0x4, fixed_abs, tag = 'smem constant byte address 0x4 - core index']
  #allocation1 [shape = 'u32[72,128]{1,0:T(1,128)}', space=vmem, size = 0x9000, scoped, tag = 'internal scratch']
  %s0 = inlined_call_operand.vmem [shape: f32[8,128], index: 0, kind: input, shape index: {}]
  %s1 = inlined_call_operand.vmem [shape: f32[128,8], index: 1, kind: input, shape index: {}]
  %s2 = inlined_call_operand.vmem [shape: f32[48,64], index: 2, kind: input, shape index: {}]
  %s3 = inlined_call_operand.vmem [shape: f32[48,1], index: 3, kind: input, shape index: {}]
  %s4 = inlined_call_operand.hbm [shape: f32[8,128], index: 4, kind: output, shape index: {}]
  %s5 = sld [smem:[#allocation0]]
  $region26: #{tpu_custom_call.1} parent=0
    _
  %s7 = ssub.s32 1, %s5
  %s8 = scalar_select 0, %s7, %s5
  $region1: #{tpu_custom_call.1} parent=0
    #allocation2 [shape = 'u8[4096]{0}', space=vmem, size = 0x1000, scoped, tag = 'output window, operand 0, single buffered']
    #allocation3 [shape = 's32[1]{0}', space=sflag, size = 0x4, scoped, tag = 'scoped memory for tpu_custom_call.1']
    %9 = vsyncpa [#allocation3], 0
    // Predicated region
    $region2: #{tpu_custom_call.1} parent=1 // pred_check
      _
    $region3: #{tpu_custom_call.1} parent=1 // pred_check_branch
      %11 = sbr.rel (0) target = $region5
    $region4: #{tpu_custom_call.1} parent=1 // pred_region
      _
    $region5: #{tpu_custom_call.1} parent=1 // pred_fallthru
      _
    // Predicated region
    $region6: #{tpu_custom_call.1} parent=1 // pred_check
      _
    $region7: #{tpu_custom_call.1} parent=1 // pred_check_branch
      %13 = sbr.rel (0) target = $region9
    $region8: #{tpu_custom_call.1} parent=1 // pred_region
      _
    $region9: #{tpu_custom_call.1} parent=1 // pred_fallthru
      _
    // Predicated region
    $region10: #{tpu_custom_call.1} parent=1 // pred_check
      _
    $region11: #{tpu_custom_call.1} parent=1 // pred_check_branch
      %15 = sbr.rel (0) target = $region13
    $region12: #{tpu_custom_call.1} parent=1 // pred_region
      _
    $region13: #{tpu_custom_call.1} parent=1 // pred_fallthru
      _
    // Predicated region
    $region14: #{tpu_custom_call.1} parent=1 // pred_check
      _
    $region15: #{tpu_custom_call.1} parent=1 // pred_check_branch
      %17 = sbr.rel (0) target = $region17
    $region16: #{tpu_custom_call.1} parent=1 // pred_region
      _
    $region17: #{tpu_custom_call.1} parent=1 // pred_fallthru
      _
    %v18 = vld [vmem:[%s0] sm:$0xff]
    %v19 = vld [vmem:[%s1] sm:$0xff]
    %v20 = vld [vmem:[%s1 + $0x8] sm:$0xff]
    %v21 = vld [vmem:[%s1 + $0x10] sm:$0xff]
    %v22 = vld [vmem:[%s1 + $0x18] sm:$0xff]
    %v23 = vld [vmem:[%s1 + $0x20] sm:$0xff]
    %v24 = vld [vmem:[%s1 + $0x28] sm:$0xff]
    %v25 = vld [vmem:[%s1 + $0x30] sm:$0xff]
    %v26 = vld [vmem:[%s1 + $0x38] sm:$0xff]
    %vm27 = vcmask 64512
    %v29 = vsel %vm27, %v19, 0
    %v32 = vsel %vm27, %v20, 0
    %v35 = vsel %vm27, %v21, 0
    %v38 = vsel %vm27, %v22, 0
    %v41 = vsel %vm27, %v23, 0
    %v44 = vsel %vm27, %v24, 0
    %v47 = vsel %vm27, %v25, 0
    %v50 = vsel %vm27, %v26, 0
    %52 = vmatpush.msra.mxu0 0.0
    %53 = vmatpush.msra.mxu0 0.0
    %54 = vmatpush.msra.mxu0 0.0
    %55 = vmatpush.msra.mxu0 0.0
    %56 = vmatpush.msra.mxu0 0.0
    %57 = vmatpush.msra.mxu0 0.0
    %58 = vmatpush.msra.mxu0 0.0
    %59 = vmatpush.msra.mxu0 0.0
    %60 = vmatpush.msra.mxu0 0.0
    %61 = vmatpush.msra.mxu0 0.0
    %62 = vmatpush.msra.mxu0 0.0
    %63 = vmatpush.msra.mxu0 0.0
    %64 = vmatpush.msra.mxu0 0.0
    %65 = vmatpush.msra.mxu0 0.0
    %66 = vmatpush.msra.mxu0 0.0
    %67 = vmatpush.msra.mxu0 %v18
    %68 = vmatmul.f32.gmra.mxu0 %v29
    %v69 = vpop.f32.mrf.mxu0
    %v70 = vadd.f32 0.0, %v69
    %71 = vmatmul.f32.gmra.mxu0 %v32
    %v72 = vpop.f32.mrf.mxu0
    %v73 = vadd.f32 0.0, %v72
    %74 = vmatmul.f32.gmra.mxu0 %v35
    %v75 = vpop.f32.mrf.mxu0
    %v76 = vadd.f32 0.0, %v75
    %77 = vmatmul.f32.gmra.mxu0 %v38
    %v78 = vpop.f32.mrf.mxu0
    %v79 = vadd.f32 0.0, %v78
    %80 = vmatmul.f32.gmra.mxu0 %v41
    %v81 = vpop.f32.mrf.mxu0
    %v82 = vadd.f32 0.0, %v81
    %83 = vmatmul.f32.gmra.mxu0 %v44
    %v84 = vpop.f32.mrf.mxu0
    %v85 = vadd.f32 0.0, %v84
    %86 = vmatmul.f32.gmra.mxu0 %v47
    %v87 = vpop.f32.mrf.mxu0
    %v88 = vadd.f32 0.0, %v87
    %89 = vmatmul.f32.gmra.mxu0 %v50
    %v90 = vpop.f32.mrf.mxu0
    %v91 = vadd.f32 0.0, %v90
    %92 = vdwg.mxu0
    %v93 = vtanh.pop %v70
    %v94 = vtanh.pop %v73
    %v95 = vtanh.pop %v76
    %v96 = vtanh.pop %v79
    %v97 = vtanh.pop %v82
    %v98 = vtanh.pop %v85
    %v99 = vtanh.pop %v88
    %v100 = vtanh.pop %v91
    %v101 = vld [vmem:[%s2] sm:$0xff]
    %v102 = vld [vmem:[%s2 + $0x8] sm:$0xff]
    %v103 = vld [vmem:[%s2 + $0x10] sm:$0xff]
    %v104 = vld [vmem:[%s3] sm:$0xff]
    %v105 = vld [vmem:[%s3 + $0x8] sm:$0xff]
    %v106 = vld [vmem:[%s3 + $0x10] sm:$0xff]
    %108 = vset.pattern.permute.xlu0 0
    %109 = vperm.xlu0 %108, %v104
    %v110 = vpop.permute.xlu0 %109
    %113 = vset.pattern.permute.xlu0 0
    %114 = vperm.xlu0 %113, %v105
    %v115 = vpop.permute.xlu0 %114
    %118 = vset.pattern.permute.xlu0 0
    %119 = vperm.xlu0 %118, %v106
    %v120 = vpop.permute.xlu0 %119
    %vm122 = vcmask 523264
    %v124 = vsel %vm122, %v101, 0
    %v127 = vsel %vm122, %v102, 0
    %v130 = vsel %vm122, %v103, 0
    %132 = vmatpush.msra.mxu0 0.0
    %133 = vmatpush.msra.mxu0 0.0
    %134 = vmatpush.msra.mxu0 0.0
    %135 = vmatpush.msra.mxu0 0.0
    %136 = vmatpush.msra.mxu0 0.0
    %137 = vmatpush.msra.mxu0 0.0
    %138 = vmatpush.msra.mxu0 0.0
    %139 = vmatpush.msra.mxu0 0.0
    %140 = vmatpush.msra.mxu0 %v100
    %141 = vmatpush.msra.mxu0 %v99
    %142 = vmatpush.msra.mxu0 %v98
    %143 = vmatpush.msra.mxu0 %v97
    %144 = vmatpush.msra.mxu0 %v96
    %145 = vmatpush.msra.mxu0 %v95
    %146 = vmatpush.msra.mxu0 %v94
    %147 = vmatpush.msra.mxu0 %v93
    %148 = vmatmul.f32.gmra.mxu0 %v124
    %v149 = vpop.f32.mrf.mxu0
    %v150 = vadd.f32 %v110, %v149
    %151 = vmatmul.f32.gmra.mxu0 %v127
    %v152 = vpop.f32.mrf.mxu0
    %v153 = vadd.f32 %v115, %v152
    %154 = vmatmul.f32.gmra.mxu0 %v130
    %v155 = vpop.f32.mrf.mxu0
    %v156 = vadd.f32 %v120, %v155
    %157 = vdwg.mxu0
    %v158 = vmul.f32 %v153, 1.442695
    %v159 = vpow.pop %v158
    %v160 = vmul.f32 %v18, %v159
    %v161 = vadd.f32 %v150, %v160
    %v162 = vld [vmem:[%s1 + $0x40] sm:$0xff]
    %v163 = vld [vmem:[%s1 + $0x48] sm:$0xff]
    %v164 = vld [vmem:[%s1 + $0x50] sm:$0xff]
    %v165 = vld [vmem:[%s1 + $0x58] sm:$0xff]
    %v166 = vld [vmem:[%s1 + $0x60] sm:$0xff]
    %v167 = vld [vmem:[%s1 + $0x68] sm:$0xff]
    %v168 = vld [vmem:[%s1 + $0x70] sm:$0xff]
    %v169 = vld [vmem:[%s1 + $0x78] sm:$0xff]
    %v171 = vsel %vm27, %v162, 0
    %v174 = vsel %vm27, %v163, 0
    %v177 = vsel %vm27, %v164, 0
    %v180 = vsel %vm27, %v165, 0
    %v183 = vsel %vm27, %v166, 0
    %v186 = vsel %vm27, %v167, 0
    %v189 = vsel %vm27, %v168, 0
    %v192 = vsel %vm27, %v169, 0
    %194 = vmatpush.msra.mxu0 0.0
    %195 = vmatpush.msra.mxu0 0.0
    %196 = vmatpush.msra.mxu0 0.0
    %197 = vmatpush.msra.mxu0 0.0
    %198 = vmatpush.msra.mxu0 0.0
    %199 = vmatpush.msra.mxu0 0.0
    %200 = vmatpush.msra.mxu0 0.0
    %201 = vmatpush.msra.mxu0 0.0
    %202 = vmatpush.msra.mxu0 0.0
    %203 = vmatpush.msra.mxu0 0.0
    %204 = vmatpush.msra.mxu0 0.0
    %205 = vmatpush.msra.mxu0 0.0
    %206 = vmatpush.msra.mxu0 0.0
    %207 = vmatpush.msra.mxu0 0.0
    %208 = vmatpush.msra.mxu0 0.0
    %209 = vmatpush.msra.mxu0 %v161
    %210 = vmatmul.f32.gmra.mxu0 %v171
    %v211 = vpop.f32.mrf.mxu0
    %v212 = vadd.f32 0.0, %v211
    %213 = vmatmul.f32.gmra.mxu0 %v174
    %v214 = vpop.f32.mrf.mxu0
    %v215 = vadd.f32 0.0, %v214
    %216 = vmatmul.f32.gmra.mxu0 %v177
    %v217 = vpop.f32.mrf.mxu0
    %v218 = vadd.f32 0.0, %v217
    %219 = vmatmul.f32.gmra.mxu0 %v180
    %v220 = vpop.f32.mrf.mxu0
    %v221 = vadd.f32 0.0, %v220
    %222 = vmatmul.f32.gmra.mxu0 %v183
    %v223 = vpop.f32.mrf.mxu0
    %v224 = vadd.f32 0.0, %v223
    %225 = vmatmul.f32.gmra.mxu0 %v186
    %v226 = vpop.f32.mrf.mxu0
    %v227 = vadd.f32 0.0, %v226
    %228 = vmatmul.f32.gmra.mxu0 %v189
    %v229 = vpop.f32.mrf.mxu0
    %v230 = vadd.f32 0.0, %v229
    %231 = vmatmul.f32.gmra.mxu0 %v192
    %v232 = vpop.f32.mrf.mxu0
    %v233 = vadd.f32 0.0, %v232
    %234 = vdwg.mxu0
    %v235 = vtanh.pop %v212
    %v236 = vtanh.pop %v215
    %v237 = vtanh.pop %v218
    %v238 = vtanh.pop %v221
    %v239 = vtanh.pop %v224
    %v240 = vtanh.pop %v227
    %v241 = vtanh.pop %v230
    %v242 = vtanh.pop %v233
    %v243 = vld [vmem:[%s2 + $0x18] sm:$0xff]
    %v244 = vld [vmem:[%s2 + $0x20] sm:$0xff]
    %v245 = vld [vmem:[%s2 + $0x28] sm:$0xff]
    %v246 = vld [vmem:[%s3 + $0x18] sm:$0xff]
    %v247 = vld [vmem:[%s3 + $0x20] sm:$0xff]
    %v248 = vld [vmem:[%s3 + $0x28] sm:$0xff]
    %250 = vset.pattern.permute.xlu0 0
    %251 = vperm.xlu0 %250, %v246
    %v252 = vpop.permute.xlu0 %251
    %255 = vset.pattern.permute.xlu0 0
    %256 = vperm.xlu0 %255, %v247
    %v257 = vpop.permute.xlu0 %256
    %260 = vset.pattern.permute.xlu0 0
    %261 = vperm.xlu0 %260, %v248
    %v262 = vpop.permute.xlu0 %261
    %v265 = vsel %vm122, %v243, 0
    %v268 = vsel %vm122, %v244, 0
    %v271 = vsel %vm122, %v245, 0
    %273 = vmatpush.msra.mxu0 0.0
    %274 = vmatpush.msra.mxu0 0.0
    %275 = vmatpush.msra.mxu0 0.0
    %276 = vmatpush.msra.mxu0 0.0
    %277 = vmatpush.msra.mxu0 0.0
    %278 = vmatpush.msra.mxu0 0.0
    %279 = vmatpush.msra.mxu0 0.0
    %280 = vmatpush.msra.mxu0 0.0
    %281 = vmatpush.msra.mxu0 %v242
    %282 = vmatpush.msra.mxu0 %v241
    %283 = vmatpush.msra.mxu0 %v240
    %284 = vmatpush.msra.mxu0 %v239
    %285 = vmatpush.msra.mxu0 %v238
    %286 = vmatpush.msra.mxu0 %v237
    %287 = vmatpush.msra.mxu0 %v236
    %288 = vmatpush.msra.mxu0 %v235
    %289 = vmatmul.f32.gmra.mxu0 %v265
    %v290 = vpop.f32.mrf.mxu0
    %v291 = vadd.f32 %v252, %v290
    %292 = vmatmul.f32.gmra.mxu0 %v268
    %v293 = vpop.f32.mrf.mxu0
    %v294 = vadd.f32 %v257, %v293
    %295 = vmatmul.f32.gmra.mxu0 %v271
    %v296 = vpop.f32.mrf.mxu0
    %v297 = vadd.f32 %v262, %v296
    %298 = vdwg.mxu0
    %v299 = vmul.f32 %v294, 1.442695
    %v300 = vpow.pop %v299
    %v301 = vmul.f32 %v161, %v300
    %v302 = vadd.f32 %v291, %v301
    %v303 = vadd.f32 %v156, %v297
    %v304 = vlaneseq
    %v305 = vshrl.u32 %v304, 7
    %vm306 = vcmp.eq.s32.totalorder %v305, 5
    %v307 = vperm.slane %v303, 0
    %v308 = vsel %vm306, %v307, %v302
    %309 = vst [vmem:[#allocation2] sm:$0xff] %v308
    // Predicated region
    $region18: #{tpu_custom_call.1} parent=1 // pred_check
      _
    $region19: #{tpu_custom_call.1} parent=1 // pred_check_branch
      %311 = sbr.rel (0) target = $region21
    $region20: #{tpu_custom_call.1} parent=1 // pred_region
      %313 = vsyncadd [#allocation3], 0
      %s315 = sshll.u32 [#allocation2], 4
      %s316 = int_to_ptr.vmem [resolvable:$true] %s315
      %s317 = sshll.u32 %s4, 4
      %s318 = int_to_ptr.hbm [resolvable:$true] %s317
      %320 = dma.vmem_to_hbm [thread:$0]  %s316, 128, %s318, [#allocation3]
    $region21: #{tpu_custom_call.1} parent=1 // pred_fallthru
      _
    // Predicated region
    $region22: #{tpu_custom_call.1} parent=1 // pred_check
      _
    $region23: #{tpu_custom_call.1} parent=1 // pred_check_branch
      %322 = sbr.rel (0) target = $region25
    $region24: #{tpu_custom_call.1} parent=1 // pred_region
      %324 = dma.done [#allocation3], 128
    $region25: #{tpu_custom_call.1} parent=1 // pred_fallthru
      _
    %325 = vsyncpa [#allocation3], 1

</llo_original>
